<compile_context>
chip_gen: v7x
topology: tpu7x:2x2x1
jax: 0.10.0
libtpu: 0.0.40
codegen_flags: <defaults>
</compile_context>

<pallas_src>
import jax
import jax.numpy as jnp
from jax.experimental import pallas as pl
from jax.experimental.pallas import tpu as pltpu

_NEG_BIG = -1e30  # bias for padded softmax columns (exp underflows to exactly 0 in f32)


def _round_up(x, m):
    return ((x + m - 1) // m) * m


def _cdiv(a, b):
    return (a + b - 1) // b


# ----------------------------------------------------------------------------- kernel
def _attention1_kernel(q_ref, k_ref, v_ref, wU_ref, wW_ref, bUW_ref, wV_ref, bV_ref,
                       out_ref, alpha_ref):
    # Cast the f32 row tiles to bf16 in-kernel (free on the VPU, halves nothing
    # on HBM because the inputs were never re-materialized on the host).
    q = q_ref[...].astype(jnp.bfloat16)
    k = k_ref[...].astype(jnp.bfloat16)

    # proj = query @ U_w.T + key @ W_w.T + (U_b + W_b)
    # Two MXU calls (contraction dim = d), f32 accumulation; output dim padded
    # to 128 with zero weight columns / zero bias -> lane-dense result.
    proj = (jnp.dot(q, wU_ref[...], preferred_element_type=jnp.float32)
            + jnp.dot(k, wW_ref[...], preferred_element_type=jnp.float32)
            + bUW_ref[...])

    # tanh in f32 (EUP). Padded columns are tanh(0) == 0 exactly.
    k_q = jnp.tanh(proj)

    # logits = k_q @ V_w.T + V_b ; padded rows of wV are zero, padded bias is -1e30.
    logits = jnp.dot(k_q.astype(jnp.bfloat16), wV_ref[...],
                     preferred_element_type=jnp.float32) + bV_ref[...]

    # Numerically stable softmax along the last axis (f32 math).
    m = jnp.max(logits, axis=-1, keepdims=True)
    e = jnp.exp(logits - m)
    denom = jnp.sum(e, axis=-1, keepdims=True)
    # Exact reciprocal on (TM, 1) scalars: keeps row sums at f32 accuracy.
    alpha = e * (1.0 / denom)

    alpha_ref[...] = alpha

    # out = alpha @ value   (padded value rows/cols are zero)
    out_ref[...] = jnp.dot(alpha.astype(jnp.bfloat16), v_ref[...],
                           preferred_element_type=jnp.float32)


# ----------------------------------------------------------------------------- wrapper
def attention1_forward(query, key, value, params):
    """params = dict with W_w, W_b, U_w, U_b, V_w, V_b (PyTorch Linear layout)."""
    N, q_size = query.shape
    Nk, k_size = key.shape
    S, v_dim = value.shape
    seq_len = params["V_w"].shape[0]
    assert q_size == k_size, "query_p + key_p requires q_size == k_size"
    assert Nk == N, "query and key must have the same number of rows"
    assert S == seq_len, "bmm requires value rows == seq_len"
    assert params["V_w"].shape[1] == q_size, "linear_v is applied to k_q (size q_size)"

    d = q_size
    Dp = _round_up(d, 128)            # lane-dense projection output / logits contraction
    S_pad = _round_up(seq_len, 128)   # lane-dense alpha / logits
    V_pad = _round_up(v_dim, 128)     # lane-dense out

    # ---- VMEM capacity (generation-aware, safe fallback) ------------------------
    try:
        vmem_cap = int(pltpu.get_tpu_info().vmem_capacity_bytes)
    except Exception:
        vmem_cap = 64 * 1024 * 1024   # conservative: v7x per-TensorCore VMEM

    # Resident inputs are double-buffered by Pallas even with a constant index_map.
    resident_bytes = 2 * (S_pad * V_pad * 2        # value (bf16)
                          + 2 * d * Dp * 2          # wU + wW (bf16)
                          + Dp * S_pad * 2          # wV (bf16)
                          + (Dp + S_pad) * 4)       # biases (f32)

    def _tile_bytes(tm):
        return (2 * tm * d * 4 * 2                  # q, k tiles (f32, double-buffered)
                + 2 * tm * (S_pad + V_pad) * 4)     # out + alpha tiles (f32, double-buffered)

    # ---- row tiling: VMEM-aware, minimal over-padding, >=2 grid steps if possible
    headroom = 24 * 1024 * 1024
    tm_cap = 256
    while tm_cap > 8 and resident_bytes + _tile_bytes(tm_cap) > vmem_cap - headroom:
        tm_cap //= 2

    n_tiles = _cdiv(N, tm_cap)
    if n_tiles == 1 and N >= 16:
        n_tiles = 2                                 # let v7x's 2nd TensorCore work
    TM = _round_up(_cdiv(N, n_tiles), 8)
    N_pad = TM * n_tiles

    bytes_needed = resident_bytes + _tile_bytes(TM)
    vmem_limit = max(min(bytes_needed + (8 << 20), vmem_cap - (8 << 20)), 32 << 20)
    vmem_limit = min(vmem_limit, vmem_cap)

    # ---- host-side operand prep (no q/k concat, no q/k dtype cast) --------------
    q_p = query.astype(jnp.float32)
    k_p = key.astype(jnp.float32)
    if N_pad != N:
        q_p = jnp.pad(q_p, ((0, N_pad - N), (0, 0)))
        k_p = jnp.pad(k_p, ((0, N_pad - N), (0, 0)))

    # Projection weights, transposed (lane-contiguous contraction), output dim
    # padded to Dp with zero columns; fused bias padded with zeros.
    wU = jnp.pad(params["U_w"].T, ((0, 0), (0, Dp - d))).astype(jnp.bfloat16)
    wW = jnp.pad(params["W_w"].T, ((0, 0), (0, Dp - d))).astype(jnp.bfloat16)
    bUW = jnp.pad(params["U_b"] + params["W_b"], (0, Dp - d)).reshape(1, Dp)
    bUW = bUW.astype(jnp.float32)

    # V_w.T padded: zero rows (padded k_q features), zero cols (padded seq positions);
    # padded bias columns get -1e30 so exp() underflows to exactly 0.
    wV = jnp.pad(params["V_w"].T, ((0, Dp - d), (0, S_pad - seq_len))).astype(jnp.bfloat16)
    bV = jnp.pad(params["V_b"], (0, S_pad - seq_len),
                 constant_values=_NEG_BIG).reshape(1, S_pad).astype(jnp.float32)

    # value padded with zero rows/cols
    value_p = jnp.pad(value, ((0, S_pad - seq_len), (0, V_pad - v_dim))).astype(jnp.bfloat16)

    # ---- pallas_call -------------------------------------------------------------
    grid = (N_pad // TM,)

    def tiled(shape):
        return pl.BlockSpec(shape, lambda i: (i, 0))

    def resident(shape):
        return pl.BlockSpec(shape, lambda i: (0, 0))

    out_shapes = (jax.ShapeDtypeStruct((N_pad, V_pad), jnp.float32),
                  jax.ShapeDtypeStruct((N_pad, S_pad), jnp.float32))

    out_p, alpha_p = pl.pallas_call(
        _attention1_kernel,
        out_shape=out_shapes,
        grid=grid,
        in_specs=[
            tiled((TM, d)),              # query tile (f32, cast in-kernel)
            tiled((TM, d)),              # key tile   (f32, cast in-kernel)
            resident((S_pad, V_pad)),    # value (bf16)
            resident((d, Dp)),           # U_w.T padded
            resident((d, Dp)),           # W_w.T padded
            resident((1, Dp)),           # U_b + W_b padded
            resident((Dp, S_pad)),       # V_w.T padded
            resident((1, S_pad)),        # V_b padded with -1e30
        ],
        out_specs=(tiled((TM, V_pad)), tiled((TM, S_pad))),
        compiler_params=pltpu.CompilerParams(
            dimension_semantics=("parallel",),
            vmem_limit_bytes=int(vmem_limit)),
    )(q_p, k_p, value_p, wU, wW, bUW, wV, bV)

    # slice padding back off
    out = out_p[:N, :v_dim]
    alpha = alpha_p[:N, :seq_len]
    return out, alpha


# ----------------------------------------------------------------------------- helpers
def init_params(key_rng, q_size, k_size, v_size, seq_len):
    ks = jax.random.split(key_rng, 6)
    scale = 0.1
    return {
        # nn.Linear(k_size, k_size): weight (k_size, k_size), bias (k_size,)
        "W_w": scale * jax.random.normal(ks[0], (k_size, k_size), jnp.float32),
        "W_b": scale * jax.random.normal(ks[1], (k_size,), jnp.float32),
        # nn.Linear(q_size, q_size)
        "U_w": scale * jax.random.normal(ks[2], (q_size, q_size), jnp.float32),
        "U_b": scale * jax.random.normal(ks[3], (q_size,), jnp.float32),
        # nn.Linear(v_size, seq_len)
        "V_w": scale * jax.random.normal(ks[4], (seq_len, v_size), jnp.float32),
        "V_b": scale * jax.random.normal(ks[5], (seq_len,), jnp.float32),
    }


def reference_forward(query, key, value, p):
    k = key @ p["W_w"].T + p["W_b"]
    q = query @ p["U_w"].T + p["U_b"]
    kq = jnp.tanh(q + k)
    logits = kq @ p["V_w"].T + p["V_b"]
    alpha = jax.nn.softmax(logits, axis=-1)
    return alpha @ value, alpha


if __name__ == "__main__":
    # small shapes consistent with the module: q_size == k_size == v_size
    N = 8          # number of query/key rows
    q_size = k_size = v_size = 32
    seq_len = 8    # value must have seq_len rows for the bmm to be valid

    root = jax.random.PRNGKey(0)
    kq_, kk_, kv_, kp_ = jax.random.split(root, 4)
    query = jax.random.normal(kq_, (N, q_size), jnp.float32)
    key = jax.random.normal(kk_, (N, k_size), jnp.float32)
    value = jax.random.normal(kv_, (seq_len, v_size), jnp.float32)
    params = init_params(kp_, q_size, k_size, v_size, seq_len)

    out, alpha = attention1_forward(query, key, value, params)
    jax.block_until_ready((out, alpha))

    ref_out, ref_alpha = reference_forward(query, key, value, params)
    # bf16 matmul operands -> slightly looser tolerance on values
    assert out.shape == ref_out.shape and alpha.shape == ref_alpha.shape
    assert jnp.allclose(out, ref_out, atol=2e-2, rtol=2e-2)
    assert jnp.allclose(alpha, ref_alpha, atol=2e-2, rtol=2e-2)
    # exact f32 normalization -> alpha rows sum to 1 well within 1e-3
    assert jnp.allclose(jnp.sum(alpha, axis=-1), jnp.ones((N,)), atol=1e-3)

    print("KERNEL_OK")
</pallas_src>

<mosaic_0001>
module attributes {stable_mosaic.version = 11 : i64} {
  func.func @_attention1_kernel(%arg0: i32, %arg1: memref<8x32xf32, #tpu.memory_space<vmem>>, %arg2: memref<8x32xf32, #tpu.memory_space<vmem>>, %arg3: memref<128x128xbf16, #tpu.memory_space<vmem>>, %arg4: memref<32x128xbf16, #tpu.memory_space<vmem>>, %arg5: memref<32x128xbf16, #tpu.memory_space<vmem>>, %arg6: memref<1x128xf32, #tpu.memory_space<vmem>>, %arg7: memref<128x128xbf16, #tpu.memory_space<vmem>>, %arg8: memref<1x128xf32, #tpu.memory_space<vmem>>, %arg9: memref<8x128xf32, #tpu.memory_space<vmem>>, %arg10: memref<8x128xf32, #tpu.memory_space<vmem>>) attributes {dimension_semantics = [#tpu.dimension_semantics<parallel>], iteration_bounds = array<i64: 1>, scalar_prefetch = 0 : i64, scratch_operands = 0 : i64, tpu.core_type = #tpu.core_type<tc>, window_params = [{transform_indices = @transform_0, window_bounds = array<i64: 8, 32>}, {transform_indices = @transform_1, window_bounds = array<i64: 8, 32>}, {pipeline_mode = #tpu.pipeline_mode<synchronous>, transform_indices = @transform_2, window_bounds = array<i64: 128, 128>}, {pipeline_mode = #tpu.pipeline_mode<synchronous>, transform_indices = @transform_3, window_bounds = array<i64: 32, 128>}, {pipeline_mode = #tpu.pipeline_mode<synchronous>, transform_indices = @transform_4, window_bounds = array<i64: 32, 128>}, {pipeline_mode = #tpu.pipeline_mode<synchronous>, transform_indices = @transform_5, window_bounds = array<i64: 1, 128>}, {pipeline_mode = #tpu.pipeline_mode<synchronous>, transform_indices = @transform_6, window_bounds = array<i64: 128, 128>}, {pipeline_mode = #tpu.pipeline_mode<synchronous>, transform_indices = @transform_7, window_bounds = array<i64: 1, 128>}, {transform_indices = @transform_8, window_bounds = array<i64: 8, 128>}, {transform_indices = @transform_9, window_bounds = array<i64: 8, 128>}]} {
    %c0 = arith.constant 0 : index
    %c0_0 = arith.constant 0 : index
    %0 = vector.load %arg1[%c0, %c0_0] : memref<8x32xf32, #tpu.memory_space<vmem>>, vector<8x32xf32>
    %1 = arith.truncf %0 : vector<8x32xf32> to vector<8x32xbf16>
    %c0_1 = arith.constant 0 : index
    %c0_2 = arith.constant 0 : index
    %2 = vector.load %arg2[%c0_1, %c0_2] : memref<8x32xf32, #tpu.memory_space<vmem>>, vector<8x32xf32>
    %3 = arith.truncf %2 : vector<8x32xf32> to vector<8x32xbf16>
    %c0_3 = arith.constant 0 : index
    %c0_4 = arith.constant 0 : index
    %4 = vector.load %arg4[%c0_3, %c0_4] : memref<32x128xbf16, #tpu.memory_space<vmem>>, vector<32x128xbf16>
    %cst = arith.constant dense<0.000000e+00> : vector<8x128xf32>
    %5 = tpu.matmul %1, %4, %cst {dimension_numbers = #tpu.dot_dimension_numbers<[1], [0], [0], [1], [0, 0, 1, 1], [], []>} : vector<8x32xbf16>, vector<32x128xbf16>, vector<8x128xf32> -> vector<8x128xf32>
    %c0_5 = arith.constant 0 : index
    %c0_6 = arith.constant 0 : index
    %6 = vector.load %arg5[%c0_5, %c0_6] : memref<32x128xbf16, #tpu.memory_space<vmem>>, vector<32x128xbf16>
    %cst_7 = arith.constant dense<0.000000e+00> : vector<8x128xf32>
    %7 = tpu.matmul %3, %6, %cst_7 {dimension_numbers = #tpu.dot_dimension_numbers<[1], [0], [0], [1], [0, 0, 1, 1], [], []>} : vector<8x32xbf16>, vector<32x128xbf16>, vector<8x128xf32> -> vector<8x128xf32>
    %8 = arith.addf %5, %7 : vector<8x128xf32>
    %c0_8 = arith.constant 0 : index
    %c0_9 = arith.constant 0 : index
    %9 = vector.load %arg6[%c0_8, %c0_9] : memref<1x128xf32, #tpu.memory_space<vmem>>, vector<1x128xf32>
    %10 = vector.broadcast %9 : vector<1x128xf32> to vector<8x128xf32>
    %11 = arith.addf %8, %10 : vector<8x128xf32>
    %12 = math.tanh %11 : vector<8x128xf32>
    %13 = arith.truncf %12 : vector<8x128xf32> to vector<8x128xbf16>
    %c0_10 = arith.constant 0 : index
    %c0_11 = arith.constant 0 : index
    %14 = vector.load %arg7[%c0_10, %c0_11] : memref<128x128xbf16, #tpu.memory_space<vmem>>, vector<128x128xbf16>
    %cst_12 = arith.constant dense<0.000000e+00> : vector<8x128xf32>
    %15 = tpu.matmul %13, %14, %cst_12 {dimension_numbers = #tpu.dot_dimension_numbers<[1], [0], [0], [1], [0, 0, 1, 1], [], []>} : vector<8x128xbf16>, vector<128x128xbf16>, vector<8x128xf32> -> vector<8x128xf32>
    %c0_13 = arith.constant 0 : index
    %c0_14 = arith.constant 0 : index
    %16 = vector.load %arg8[%c0_13, %c0_14] : memref<1x128xf32, #tpu.memory_space<vmem>>, vector<1x128xf32>
    %17 = vector.broadcast %16 : vector<1x128xf32> to vector<8x128xf32>
    %18 = arith.addf %15, %17 : vector<8x128xf32>
    %cst_15 = arith.constant dense<0xFF800000> : vector<8xf32>
    %19 = vector.multi_reduction <maximumf>, %18, %cst_15 [1] : vector<8x128xf32> to vector<8xf32>
    %20 = vector.shape_cast %19 : vector<8xf32> to vector<8x1xf32>
    %21 = vector.broadcast %20 : vector<8x1xf32> to vector<8x128xf32>
    %22 = arith.subf %18, %21 : vector<8x128xf32>
    %23 = math.exp %22 : vector<8x128xf32>
    %cst_16 = arith.constant dense<0.000000e+00> : vector<8xf32>
    %24 = vector.multi_reduction <add>, %23, %cst_16 [1] : vector<8x128xf32> to vector<8xf32>
    %25 = vector.shape_cast %24 : vector<8xf32> to vector<8x1xf32>
    %cst_17 = arith.constant 1.000000e+00 : f32
    %26 = vector.broadcast %cst_17 : f32 to vector<8x1xf32>
    %27 = arith.divf %26, %25 : vector<8x1xf32>
    %28 = vector.broadcast %27 : vector<8x1xf32> to vector<8x128xf32>
    %29 = arith.mulf %23, %28 : vector<8x128xf32>
    %c0_18 = arith.constant 0 : index
    %c0_19 = arith.constant 0 : index
    %30 = vector.load %arg10[%c0_18, %c0_19] : memref<8x128xf32, #tpu.memory_space<vmem>>, vector<8x128xf32>
    tpu.vector_store %arg10[%c0_18, %c0_19], %29 {strides = array<i32>} : memref<8x128xf32, #tpu.memory_space<vmem>>, vector<8x128xf32>,
    %31 = arith.truncf %29 : vector<8x128xf32> to vector<8x128xbf16>
    %c0_20 = arith.constant 0 : index
    %c0_21 = arith.constant 0 : index
    %32 = vector.load %arg3[%c0_20, %c0_21] : memref<128x128xbf16, #tpu.memory_space<vmem>>, vector<128x128xbf16>
    %cst_22 = arith.constant dense<0.000000e+00> : vector<8x128xf32>
    %33 = tpu.matmul %31, %32, %cst_22 {dimension_numbers = #tpu.dot_dimension_numbers<[1], [0], [0], [1], [0, 0, 1, 1], [], []>} : vector<8x128xbf16>, vector<128x128xbf16>, vector<8x128xf32> -> vector<8x128xf32>
    %c0_23 = arith.constant 0 : index
    %c0_24 = arith.constant 0 : index
    %34 = vector.load %arg9[%c0_23, %c0_24] : memref<8x128xf32, #tpu.memory_space<vmem>>, vector<8x128xf32>
    tpu.vector_store %arg9[%c0_23, %c0_24], %33 {strides = array<i32>} : memref<8x128xf32, #tpu.memory_space<vmem>>, vector<8x128xf32>,
    return
  }
  func.func @transform_0(%arg0: i32) -> (i32, i32) {
    %c0_i32 = arith.constant 0 : i32
    %c0_i32_0 = arith.constant 0 : i32
    return %arg0, %c0_i32 : i32, i32
  }
  func.func @transform_1(%arg0: i32) -> (i32, i32) {
    %c0_i32 = arith.constant 0 : i32
    %c0_i32_0 = arith.constant 0 : i32
    return %arg0, %c0_i32 : i32, i32
  }
  func.func @transform_2(%arg0: i32) -> (i32, i32) {
    %c0_i32 = arith.constant 0 : i32
    %c0_i32_0 = arith.constant 0 : i32
    %c0_i32_1 = arith.constant 0 : i32
    return %c0_i32, %c0_i32_0 : i32, i32
  }
  func.func @transform_3(%arg0: i32) -> (i32, i32) {
    %c0_i32 = arith.constant 0 : i32
    %c0_i32_0 = arith.constant 0 : i32
    %c0_i32_1 = arith.constant 0 : i32
    return %c0_i32, %c0_i32_0 : i32, i32
  }
  func.func @transform_4(%arg0: i32) -> (i32, i32) {
    %c0_i32 = arith.constant 0 : i32
    %c0_i32_0 = arith.constant 0 : i32
    %c0_i32_1 = arith.constant 0 : i32
    return %c0_i32, %c0_i32_0 : i32, i32
  }
  func.func @transform_5(%arg0: i32) -> (i32, i32) {
    %c0_i32 = arith.constant 0 : i32
    %c0_i32_0 = arith.constant 0 : i32
    %c0_i32_1 = arith.constant 0 : i32
    return %c0_i32, %c0_i32_0 : i32, i32
  }
  func.func @transform_6(%arg0: i32) -> (i32, i32) {
    %c0_i32 = arith.constant 0 : i32
    %c0_i32_0 = arith.constant 0 : i32
    %c0_i32_1 = arith.constant 0 : i32
    return %c0_i32, %c0_i32_0 : i32, i32
  }
  func.func @transform_7(%arg0: i32) -> (i32, i32) {
    %c0_i32 = arith.constant 0 : i32
    %c0_i32_0 = arith.constant 0 : i32
    %c0_i32_1 = arith.constant 0 : i32
    return %c0_i32, %c0_i32_0 : i32, i32
  }
  func.func @transform_8(%arg0: i32) -> (i32, i32) {
    %c0_i32 = arith.constant 0 : i32
    %c0_i32_0 = arith.constant 0 : i32
    return %arg0, %c0_i32 : i32, i32
  }
  func.func @transform_9(%arg0: i32) -> (i32, i32) {
    %c0_i32 = arith.constant 0 : i32
    %c0_i32_0 = arith.constant 0 : i32
    return %arg0, %c0_i32 : i32, i32
  }
}

</mosaic_0001>

<llo_original>
// kernel: tpu_custom_call.1
$region0: #{tpu_custom_call.1}
  #allocation0 [shape = 'u32[]', space=smem, size = 0x4, offset = 0x4, fixed_abs, tag = 'smem constant byte address 0x4 - core index']
  #allocation1 [shape = 'u32[144,128]{1,0:T(1,128)}', space=vmem, size = 0x12000, scoped, tag = 'internal scratch']
  %s0 = inlined_call_operand.hbm [shape: f32[8,32], index: 0, kind: input, shape index: {}]
  %s1 = inlined_call_operand.hbm [shape: f32[8,32], index: 1, kind: input, shape index: {}]
  %s2 = inlined_call_operand.hbm [shape: bf16[128,128], index: 2, kind: input, shape index: {}]
  %s3 = inlined_call_operand.hbm [shape: bf16[32,128], index: 3, kind: input, shape index: {}]
  %s4 = inlined_call_operand.hbm [shape: bf16[32,128], index: 4, kind: input, shape index: {}]
  %s5 = inlined_call_operand.vmem [shape: f32[1,128], index: 5, kind: input, shape index: {}]
  %s6 = inlined_call_operand.hbm [shape: bf16[128,128], index: 6, kind: input, shape index: {}]
  %s7 = inlined_call_operand.vmem [shape: f32[1,128], index: 7, kind: input, shape index: {}]
  %s8 = inlined_call_operand.hbm [shape: f32[8,128], index: 8, kind: output, shape index: {0}]
  %s9 = inlined_call_operand.hbm [shape: f32[8,128], index: 9, kind: output, shape index: {1}]
  %10 = xla_tuple %s8, %s9
  %s11 = sld [smem:[#allocation0]]
  $region74: #{tpu_custom_call.1} parent=0
    _
  %s13 = ssub.s32 1, %s11
  %s14 = scalar_select 0, %s13, %s11
  $region1: #{tpu_custom_call.1} parent=0
    #allocation2 [shape = 'u8[4096]{0}', space=vmem, size = 0x1000, scoped, tag = 'input window, operand 0, single buffered']
    #allocation3 [shape = 's32[1]{0}', space=sflag, size = 0x4, scoped, tag = 'scoped memory for tpu_custom_call.1']
    #allocation4 [shape = 's32[1]{0}', space=sflag, size = 0x4, scoped, tag = 'scoped memory for tpu_custom_call.1']
    #allocation5 [shape = 'u8[4096]{0}', space=vmem, size = 0x1000, scoped, tag = 'input window, operand 1, single buffered']
    #allocation6 [shape = 's32[1]{0}', space=sflag, size = 0x4, scoped, tag = 'scoped memory for tpu_custom_call.1']
    #allocation7 [shape = 'u8[32768]{0}', space=vmem, size = 0x8000, scoped, tag = 'input window, operand 2, single buffered']
    #allocation8 [shape = 'u8[8192]{0}', space=vmem, size = 0x2000, scoped, tag = 'input window, operand 3, single buffered']
    #allocation9 [shape = 's32[1]{0}', space=sflag, size = 0x4, scoped, tag = 'scoped memory for tpu_custom_call.1']
    #allocation10 [shape = 'u8[8192]{0}', space=vmem, size = 0x2000, scoped, tag = 'input window, operand 4, single buffered']
    #allocation11 [shape = 'u8[32768]{0}', space=vmem, size = 0x8000, scoped, tag = 'input window, operand 6, single buffered']
    #allocation12 [shape = 's32[1]{0}', space=sflag, size = 0x4, scoped, tag = 'scoped memory for tpu_custom_call.1']
    #allocation13 [shape = 'u8[4096]{0}', space=vmem, size = 0x1000, scoped, tag = 'output window, operand 0, single buffered']
    #allocation14 [shape = 'u8[4096]{0}', space=vmem, size = 0x1000, scoped, tag = 'output window, operand 1, single buffered']
    #allocation15 [shape = 's32[1]{0}', space=sflag, size = 0x4, scoped, tag = 'scoped memory for tpu_custom_call.1']
    %15 = vsyncpa [#allocation3], 0
    %16 = vsyncpa [#allocation6], 0
    %17 = vsyncpa [#allocation9], 0
    %18 = vsyncpa [#allocation12], 0
    %19 = vsyncpa [#allocation4], 0
    %20 = vsyncpa [#allocation15], 0
    // Predicated region
    $region2: #{tpu_custom_call.1} parent=1 // pred_check
      _
    $region3: #{tpu_custom_call.1} parent=1 // pred_check_branch
      %22 = sbr.rel (0) target = $region5
    $region4: #{tpu_custom_call.1} parent=1 // pred_region
      %s24 = ssub.s32 128, 128
      %25 = vsyncadd [#allocation3], %s24
      %s27 = sshll.u32 [#allocation2], 4
      %s28 = int_to_ptr.vmem [resolvable:$true] %s27
      %30 = dma.hbm_to_vmem [thread:$0]  %s0, 128, %s28, [#allocation3]
    $region5: #{tpu_custom_call.1} parent=1 // pred_fallthru
      _
    // Predicated region
    $region6: #{tpu_custom_call.1} parent=1 // pred_check
      _
    $region7: #{tpu_custom_call.1} parent=1 // pred_check_branch
      %32 = sbr.rel (0) target = $region9
    $region8: #{tpu_custom_call.1} parent=1 // pred_region
      %s34 = ssub.s32 128, 128
      %35 = vsyncadd [#allocation6], %s34
      %s37 = sshll.u32 [#allocation5], 4
      %s38 = int_to_ptr.vmem [resolvable:$true] %s37
      %40 = dma.hbm_to_vmem [thread:$0]  %s1, 128, %s38, [#allocation6]
    $region9: #{tpu_custom_call.1} parent=1 // pred_fallthru
      _
    // Predicated region
    $region10: #{tpu_custom_call.1} parent=1 // pred_check
      _
    $region11: #{tpu_custom_call.1} parent=1 // pred_check_branch
      %42 = sbr.rel (0) target = $region13
    $region12: #{tpu_custom_call.1} parent=1 // pred_region
      %s44 = ssub.s32 1024, 1024
      %45 = vsyncadd [#allocation6], %s44
      %s46 = sshll.u32 [#allocation7], 4
      %s47 = int_to_ptr.vmem [resolvable:$true] %s46
      %52 = dma.hbm_to_vmem [thread:$0]  %s2, 1024, %s47, [#allocation6], 64, 64, 4
    $region13: #{tpu_custom_call.1} parent=1 // pred_fallthru
      _
    // Predicated region
    $region14: #{tpu_custom_call.1} parent=1 // pred_check
      _
    $region15: #{tpu_custom_call.1} parent=1 // pred_check_branch
      %54 = sbr.rel (0) target = $region17
    $region16: #{tpu_custom_call.1} parent=1 // pred_region
      %s56 = ssub.s32 256, 256
      %57 = vsyncadd [#allocation9], %s56
      %s58 = sshll.u32 [#allocation8], 4
      %s59 = int_to_ptr.vmem [resolvable:$true] %s58
      %64 = dma.hbm_to_vmem [thread:$0]  %s3, 256, %s59, [#allocation9], 64, 64, 4
    $region17: #{tpu_custom_call.1} parent=1 // pred_fallthru
      _
    // Predicated region
    $region18: #{tpu_custom_call.1} parent=1 // pred_check
      _
    $region19: #{tpu_custom_call.1} parent=1 // pred_check_branch
      %66 = sbr.rel (0) target = $region21
    $region20: #{tpu_custom_call.1} parent=1 // pred_region
      %s68 = ssub.s32 256, 256
      %69 = vsyncadd [#allocation9], %s68
      %s70 = sshll.u32 [#allocation10], 4
      %s71 = int_to_ptr.vmem [resolvable:$true] %s70
      %76 = dma.hbm_to_vmem [thread:$0]  %s4, 256, %s71, [#allocation9], 64, 64, 4
    $region21: #{tpu_custom_call.1} parent=1 // pred_fallthru
      _
    // Predicated region
    $region22: #{tpu_custom_call.1} parent=1 // pred_check
      _
    $region23: #{tpu_custom_call.1} parent=1 // pred_check_branch
      %78 = sbr.rel (0) target = $region25
    $region24: #{tpu_custom_call.1} parent=1 // pred_region
      _
    $region25: #{tpu_custom_call.1} parent=1 // pred_fallthru
      _
    // Predicated region
    $region26: #{tpu_custom_call.1} parent=1 // pred_check
      _
    $region27: #{tpu_custom_call.1} parent=1 // pred_check_branch
      %80 = sbr.rel (0) target = $region29
    $region28: #{tpu_custom_call.1} parent=1 // pred_region
      %s82 = ssub.s32 1024, 1024
      %83 = vsyncadd [#allocation12], %s82
      %s84 = sshll.u32 [#allocation11], 4
      %s85 = int_to_ptr.vmem [resolvable:$true] %s84
      %90 = dma.hbm_to_vmem [thread:$0]  %s6, 1024, %s85, [#allocation12], 64, 64, 4
    $region29: #{tpu_custom_call.1} parent=1 // pred_fallthru
      _
    // Predicated region
    $region30: #{tpu_custom_call.1} parent=1 // pred_check
      _
    $region31: #{tpu_custom_call.1} parent=1 // pred_check_branch
      %92 = sbr.rel (0) target = $region33
    $region32: #{tpu_custom_call.1} parent=1 // pred_region
      _
    $region33: #{tpu_custom_call.1} parent=1 // pred_fallthru
      _
    // Predicated region
    $region34: #{tpu_custom_call.1} parent=1 // pred_check
      _
    $region35: #{tpu_custom_call.1} parent=1 // pred_check_branch
      %94 = sbr.rel (0) target = $region37
    $region36: #{tpu_custom_call.1} parent=1 // pred_region
      %95 = dma.done [#allocation3], 128
    $region37: #{tpu_custom_call.1} parent=1 // pred_fallthru
      _
    // Predicated region
    $region38: #{tpu_custom_call.1} parent=1 // pred_check
      _
    $region39: #{tpu_custom_call.1} parent=1 // pred_check_branch
      %97 = sbr.rel (0) target = $region41
    $region40: #{tpu_custom_call.1} parent=1 // pred_region
      %98 = dma.done [#allocation6], 128
    $region41: #{tpu_custom_call.1} parent=1 // pred_fallthru
      _
    // Predicated region
    $region42: #{tpu_custom_call.1} parent=1 // pred_check
      _
    $region43: #{tpu_custom_call.1} parent=1 // pred_check_branch
      %100 = sbr.rel (0) target = $region45
    $region44: #{tpu_custom_call.1} parent=1 // pred_region
      %101 = dma.done [#allocation6], 1024
    $region45: #{tpu_custom_call.1} parent=1 // pred_fallthru
      _
    // Predicated region
    $region46: #{tpu_custom_call.1} parent=1 // pred_check
      _
    $region47: #{tpu_custom_call.1} parent=1 // pred_check_branch
      %103 = sbr.rel (0) target = $region49
    $region48: #{tpu_custom_call.1} parent=1 // pred_region
      %104 = dma.done [#allocation9], 256
    $region49: #{tpu_custom_call.1} parent=1 // pred_fallthru
      _
    // Predicated region
    $region50: #{tpu_custom_call.1} parent=1 // pred_check
      _
    $region51: #{tpu_custom_call.1} parent=1 // pred_check_branch
      %106 = sbr.rel (0) target = $region53
    $region52: #{tpu_custom_call.1} parent=1 // pred_region
      %107 = dma.done [#allocation9], 256
    $region53: #{tpu_custom_call.1} parent=1 // pred_fallthru
      _
    // Predicated region
    $region54: #{tpu_custom_call.1} parent=1 // pred_check
      _
    $region55: #{tpu_custom_call.1} parent=1 // pred_check_branch
      %109 = sbr.rel (0) target = $region57
    $region56: #{tpu_custom_call.1} parent=1 // pred_region
      %110 = dma.done [#allocation12], 1024
    $region57: #{tpu_custom_call.1} parent=1 // pred_fallthru
      _
    %v112 = vld [vmem:[#allocation2] sm:$0xff]
    %v113 = vpack.c.bf16 %v112, %v112
    %v114 = vld [vmem:[#allocation5] sm:$0xff]
    %v115 = vpack.c.bf16 %v114, %v114
    %v116 = vld [vmem:[#allocation8] sm:$0xf]
    %v117 = vld [vmem:[#allocation8 + $0x4] sm:$0xf]
    %v118 = vld [vmem:[#allocation8 + $0x8] sm:$0xf]
    %v119 = vld [vmem:[#allocation8 + $0xc] sm:$0xf]
    %v120 = vld [vmem:[#allocation10] sm:$0xf]
    %v121 = vld [vmem:[#allocation10 + $0x4] sm:$0xf]
    %v122 = vld [vmem:[#allocation10 + $0x8] sm:$0xf]
    %v123 = vld [vmem:[#allocation10 + $0xc] sm:$0xf]
    %v128 = vunpack.c.l.b16 %v120
    %v129 = vunpack.c.l.b16 %v121
    %v130 = vunpack.c.l.b16 %v122
    %v131 = vunpack.c.l.b16 %v123
    %v132 = vpack.c.b16 %v129, %v128
    %v133 = vpack.c.b16 %v131, %v130
    %vm136 = vcmask 261120
    %v138 = vsel %vm136, %v115, 0
    %140 = vmatprep.subr.bf16.mxu0 0
    %141 = vmatpush1.bf16.msra.mxu0 %v132
    %142 = vmatprep.subr.bf16.mxu0 0
    %143 = vmatpush1.bf16.msra.mxu0 %v133
    %144 = vmatprep.subr.bf16.mxu0 0
    %145 = vmatpush1.bf16.msra.mxu0 0
    %146 = vmatprep.subr.bf16.mxu0 0
    %147 = vmatpush1.bf16.msra.mxu0 0
    %148 = vmatprep.subr.bf16.mxu0 0
    %149 = vmatpush1.bf16.msra.mxu0 0
    %150 = vmatprep.subr.bf16.mxu0 0
    %151 = vmatpush1.bf16.msra.mxu0 0
    %152 = vmatprep.subr.bf16.mxu0 0
    %153 = vmatpush1.bf16.msra.mxu0 0
    %154 = vmatprep.subr.bf16.mxu0 0
    %155 = vmatpush1.bf16.msra.mxu0 0
    %156 = vmatprep.subr.bf16.mxu0 0
    %157 = vmatpush1.bf16.msra.mxu0 0
    %158 = vmatprep.subr.bf16.mxu0 0
    %159 = vmatpush1.bf16.msra.mxu0 0
    %160 = vmatprep.subr.bf16.mxu0 0
    %161 = vmatpush1.bf16.msra.mxu0 0
    %162 = vmatprep.subr.bf16.mxu0 0
    %163 = vmatpush1.bf16.msra.mxu0 0
    %164 = vmatprep.subr.bf16.mxu0 0
    %165 = vmatpush1.bf16.msra.mxu0 0
    %166 = vmatprep.subr.bf16.mxu0 0
    %167 = vmatpush1.bf16.msra.mxu0 0
    %168 = vmatprep.subr.bf16.mxu0 0
    %169 = vmatpush1.bf16.msra.mxu0 0
    %170 = vmatprep.subr.bf16.mxu0 0
    %171 = vmatpush1.bf16.msra.mxu0 0
    %172 = vmatprep.mubr.bf16.mxu0 0
    %173 = vmatmul.mubr.bf16.gmra.mrb[0].mxu0 %v138
    %v174 = vpop.f32.mrb[0].mxu0
    %v175 = vadd.f32 0.0, %v174
    %v176 = vpop.f32.mrb[0].mxu0
    %v177 = vpop.f32.mrb[0].mxu0
    %v178 = vpop.f32.mrb[0].mxu0
    %179 = vdwg.mxu0
    %v184 = vunpack.c.l.b16 %v116
    %v185 = vunpack.c.l.b16 %v117
    %v186 = vunpack.c.l.b16 %v118
    %v187 = vunpack.c.l.b16 %v119
    %v188 = vpack.c.b16 %v185, %v184
    %v189 = vpack.c.b16 %v187, %v186
    %v193 = vsel %vm136, %v113, 0
    %195 = vmatprep.subr.bf16.mxu0 0
    %196 = vmatpush1.bf16.msra.mxu0 %v188
    %197 = vmatprep.subr.bf16.mxu0 0
    %198 = vmatpush1.bf16.msra.mxu0 %v189
    %199 = vmatprep.subr.bf16.mxu0 0
    %200 = vmatpush1.bf16.msra.mxu0 0
    %201 = vmatprep.subr.bf16.mxu0 0
    %202 = vmatpush1.bf16.msra.mxu0 0
    %203 = vmatprep.subr.bf16.mxu0 0
    %204 = vmatpush1.bf16.msra.mxu0 0
    %205 = vmatprep.subr.bf16.mxu0 0
    %206 = vmatpush1.bf16.msra.mxu0 0
    %207 = vmatprep.subr.bf16.mxu0 0
    %208 = vmatpush1.bf16.msra.mxu0 0
    %209 = vmatprep.subr.bf16.mxu0 0
    %210 = vmatpush1.bf16.msra.mxu0 0
    %211 = vmatprep.subr.bf16.mxu0 0
    %212 = vmatpush1.bf16.msra.mxu0 0
    %213 = vmatprep.subr.bf16.mxu0 0
    %214 = vmatpush1.bf16.msra.mxu0 0
    %215 = vmatprep.subr.bf16.mxu0 0
    %216 = vmatpush1.bf16.msra.mxu0 0
    %217 = vmatprep.subr.bf16.mxu0 0
    %218 = vmatpush1.bf16.msra.mxu0 0
    %219 = vmatprep.subr.bf16.mxu0 0
    %220 = vmatpush1.bf16.msra.mxu0 0
    %221 = vmatprep.subr.bf16.mxu0 0
    %222 = vmatpush1.bf16.msra.mxu0 0
    %223 = vmatprep.subr.bf16.mxu0 0
    %224 = vmatpush1.bf16.msra.mxu0 0
    %225 = vmatprep.subr.bf16.mxu0 0
    %226 = vmatpush1.bf16.msra.mxu0 0
    %227 = vmatprep.mubr.bf16.mxu0 0
    %228 = vmatmul.mubr.bf16.gmra.mrb[0].mxu0 %v193
    %v229 = vpop.f32.mrb[0].mxu0
    %v230 = vadd.f32 %v175, %v229
    %v231 = vpop.f32.mrb[0].mxu0
    %v232 = vpop.f32.mrb[0].mxu0
    %v233 = vpop.f32.mrb[0].mxu0
    %234 = vdwg.mxu0
    %v235 = vld [vmem:[%s5] sm:$0x1]
    %v237 = vlaneseq
    %v238 = vshrl.u32 %v237, 7
    %v239 = vsub.s32 0, %v238
    %v240 = vrot.slane %v235, %v239
    %v242 = vadd.f32 %v230, %v240
    %v243 = vtanh.pop %v242
    %v244 = vpack.c.bf16 %v243, %v243
    %v245 = vld [vmem:[#allocation11] sm:$0xf]
    %v246 = vld [vmem:[#allocation11 + $0x4] sm:$0xf]
    %v247 = vld [vmem:[#allocation11 + $0x8] sm:$0xf]
    %v248 = vld [vmem:[#allocation11 + $0xc] sm:$0xf]
    %v249 = vld [vmem:[#allocation11 + $0x10] sm:$0xf]
    %v250 = vld [vmem:[#allocation11 + $0x14] sm:$0xf]
    %v251 = vld [vmem:[#allocation11 + $0x18] sm:$0xf]
    %v252 = vld [vmem:[#allocation11 + $0x1c] sm:$0xf]
    %v253 = vld [vmem:[#allocation11 + $0x20] sm:$0xf]
    %v254 = vld [vmem:[#allocation11 + $0x24] sm:$0xf]
    %v255 = vld [vmem:[#allocation11 + $0x28] sm:$0xf]
    %v256 = vld [vmem:[#allocation11 + $0x2c] sm:$0xf]
    %v257 = vld [vmem:[#allocation11 + $0x30] sm:$0xf]
    %v258 = vld [vmem:[#allocation11 + $0x34] sm:$0xf]
    %v259 = vld [vmem:[#allocation11 + $0x38] sm:$0xf]
    %v260 = vld [vmem:[#allocation11 + $0x3c] sm:$0xf]
    %v261 = vld [vmem:[%s7] sm:$0x1]
    %v263 = vlaneseq
    %v264 = vshrl.u32 %v263, 7
    %v265 = vsub.s32 0, %v264
    %v266 = vrot.slane %v261, %v265
    %v284 = vunpack.c.l.b16 %v245
    %v285 = vunpack.c.l.b16 %v246
    %v286 = vunpack.c.l.b16 %v247
    %v287 = vunpack.c.l.b16 %v248
    %v288 = vunpack.c.l.b16 %v249
    %v289 = vunpack.c.l.b16 %v250
    %v290 = vunpack.c.l.b16 %v251
    %v291 = vunpack.c.l.b16 %v252
    %v292 = vunpack.c.l.b16 %v253
    %v293 = vunpack.c.l.b16 %v254
    %v294 = vunpack.c.l.b16 %v255
    %v295 = vunpack.c.l.b16 %v256
    %v296 = vunpack.c.l.b16 %v257
    %v297 = vunpack.c.l.b16 %v258
    %v298 = vunpack.c.l.b16 %v259
    %v299 = vunpack.c.l.b16 %v260
    %v300 = vpack.c.b16 %v285, %v284
    %v301 = vpack.c.b16 %v287, %v286
    %v302 = vpack.c.b16 %v289, %v288
    %v303 = vpack.c.b16 %v291, %v290
    %v304 = vpack.c.b16 %v293, %v292
    %v305 = vpack.c.b16 %v295, %v294
    %v306 = vpack.c.b16 %v297, %v296
    %v307 = vpack.c.b16 %v299, %v298
    %316 = vmatprep.subr.bf16.mxu0 0
    %317 = vmatpush1.bf16.msra.mxu0 %v300
    %318 = vmatprep.subr.bf16.mxu0 0
    %319 = vmatpush1.bf16.msra.mxu0 %v301
    %320 = vmatprep.subr.bf16.mxu0 0
    %321 = vmatpush1.bf16.msra.mxu0 %v302
    %322 = vmatprep.subr.bf16.mxu0 0
    %323 = vmatpush1.bf16.msra.mxu0 %v303
    %324 = vmatprep.subr.bf16.mxu0 0
    %325 = vmatpush1.bf16.msra.mxu0 %v304
    %326 = vmatprep.subr.bf16.mxu0 0
    %327 = vmatpush1.bf16.msra.mxu0 %v305
    %328 = vmatprep.subr.bf16.mxu0 0
    %329 = vmatpush1.bf16.msra.mxu0 %v306
    %330 = vmatprep.subr.bf16.mxu0 0
    %331 = vmatpush1.bf16.msra.mxu0 %v307
    %332 = vmatprep.subr.bf16.mxu0 0
    %333 = vmatpush1.bf16.msra.mxu0 0
    %334 = vmatprep.subr.bf16.mxu0 0
    %335 = vmatpush1.bf16.msra.mxu0 0
    %336 = vmatprep.subr.bf16.mxu0 0
    %337 = vmatpush1.bf16.msra.mxu0 0
    %338 = vmatprep.subr.bf16.mxu0 0
    %339 = vmatpush1.bf16.msra.mxu0 0
    %340 = vmatprep.subr.bf16.mxu0 0
    %341 = vmatpush1.bf16.msra.mxu0 0
    %342 = vmatprep.subr.bf16.mxu0 0
    %343 = vmatpush1.bf16.msra.mxu0 0
    %344 = vmatprep.subr.bf16.mxu0 0
    %345 = vmatpush1.bf16.msra.mxu0 0
    %346 = vmatprep.subr.bf16.mxu0 0
    %347 = vmatpush1.bf16.msra.mxu0 0
    %348 = vmatprep.mubr.bf16.mxu0 0
    %349 = vmatmul.mubr.bf16.gmra.mrb[0].mxu0 %v244
    %v350 = vpop.f32.mrb[0].mxu0
    %v351 = vadd.f32 %v266, %v350
    %v352 = vpop.f32.mrb[0].mxu0
    %v353 = vpop.f32.mrb[0].mxu0
    %v354 = vpop.f32.mrb[0].mxu0
    %355 = vdwg.mxu0
    %356 = vmax.xlane.f32.xlu0 %v351
    %v357 = vpop.xlane.xlu0 %356
    %v358 = vsub.f32 %v351, %v357
    %v359 = vmul.f32 %v358, 1.442695
    %v360 = vpow.pop %v359
    %361 = vadd.xlane.f32.xlu0 %v360
    %v362 = vpop.xlane.xlu0 %361
    %v363 = vrcp.pop %v362
    %v364 = vmul.f32 1.0, %v363
    %v365 = vmul.f32 %v360, %v364
    %366 = vst [vmem:[#allocation14] sm:$0xff] %v365
    %v367 = vpack.c.bf16 %v365, %v365
    %v368 = vld [vmem:[#allocation7] sm:$0xf]
    %v369 = vld [vmem:[#allocation7 + $0x4] sm:$0xf]
    %v370 = vld [vmem:[#allocation7 + $0x8] sm:$0xf]
    %v371 = vld [vmem:[#allocation7 + $0xc] sm:$0xf]
    %v372 = vld [vmem:[#allocation7 + $0x10] sm:$0xf]
    %v373 = vld [vmem:[#allocation7 + $0x14] sm:$0xf]
    %v374 = vld [vmem:[#allocation7 + $0x18] sm:$0xf]
    %v375 = vld [vmem:[#allocation7 + $0x1c] sm:$0xf]
    %v376 = vld [vmem:[#allocation7 + $0x20] sm:$0xf]
    %v377 = vld [vmem:[#allocation7 + $0x24] sm:$0xf]
    %v378 = vld [vmem:[#allocation7 + $0x28] sm:$0xf]
    %v379 = vld [vmem:[#allocation7 + $0x2c] sm:$0xf]
    %v380 = vld [vmem:[#allocation7 + $0x30] sm:$0xf]
    %v381 = vld [vmem:[#allocation7 + $0x34] sm:$0xf]
    %v382 = vld [vmem:[#allocation7 + $0x38] sm:$0xf]
    %v383 = vld [vmem:[#allocation7 + $0x3c] sm:$0xf]
    %v400 = vunpack.c.l.b16 %v368
    %v401 = vunpack.c.l.b16 %v369
    %v402 = vunpack.c.l.b16 %v370
    %v403 = vunpack.c.l.b16 %v371
    %v404 = vunpack.c.l.b16 %v372
    %v405 = vunpack.c.l.b16 %v373
    %v406 = vunpack.c.l.b16 %v374
    %v407 = vunpack.c.l.b16 %v375
    %v408 = vunpack.c.l.b16 %v376
    %v409 = vunpack.c.l.b16 %v377
    %v410 = vunpack.c.l.b16 %v378
    %v411 = vunpack.c.l.b16 %v379
    %v412 = vunpack.c.l.b16 %v380
    %v413 = vunpack.c.l.b16 %v381
    %v414 = vunpack.c.l.b16 %v382
    %v415 = vunpack.c.l.b16 %v383
    %v416 = vpack.c.b16 %v401, %v400
    %v417 = vpack.c.b16 %v403, %v402
    %v418 = vpack.c.b16 %v405, %v404
    %v419 = vpack.c.b16 %v407, %v406
    %v420 = vpack.c.b16 %v409, %v408
    %v421 = vpack.c.b16 %v411, %v410
    %v422 = vpack.c.b16 %v413, %v412
    %v423 = vpack.c.b16 %v415, %v414
    %432 = vmatprep.subr.bf16.mxu0 0
    %433 = vmatpush1.bf16.msra.mxu0 %v416
    %434 = vmatprep.subr.bf16.mxu0 0
    %435 = vmatpush1.bf16.msra.mxu0 %v417
    %436 = vmatprep.subr.bf16.mxu0 0
    %437 = vmatpush1.bf16.msra.mxu0 %v418
    %438 = vmatprep.subr.bf16.mxu0 0
    %439 = vmatpush1.bf16.msra.mxu0 %v419
    %440 = vmatprep.subr.bf16.mxu0 0
    %441 = vmatpush1.bf16.msra.mxu0 %v420
    %442 = vmatprep.subr.bf16.mxu0 0
    %443 = vmatpush1.bf16.msra.mxu0 %v421
    %444 = vmatprep.subr.bf16.mxu0 0
    %445 = vmatpush1.bf16.msra.mxu0 %v422
    %446 = vmatprep.subr.bf16.mxu0 0
    %447 = vmatpush1.bf16.msra.mxu0 %v423
    %448 = vmatprep.subr.bf16.mxu0 0
    %449 = vmatpush1.bf16.msra.mxu0 0
    %450 = vmatprep.subr.bf16.mxu0 0
    %451 = vmatpush1.bf16.msra.mxu0 0
    %452 = vmatprep.subr.bf16.mxu0 0
    %453 = vmatpush1.bf16.msra.mxu0 0
    %454 = vmatprep.subr.bf16.mxu0 0
    %455 = vmatpush1.bf16.msra.mxu0 0
    %456 = vmatprep.subr.bf16.mxu0 0
    %457 = vmatpush1.bf16.msra.mxu0 0
    %458 = vmatprep.subr.bf16.mxu0 0
    %459 = vmatpush1.bf16.msra.mxu0 0
    %460 = vmatprep.subr.bf16.mxu0 0
    %461 = vmatpush1.bf16.msra.mxu0 0
    %462 = vmatprep.subr.bf16.mxu0 0
    %463 = vmatpush1.bf16.msra.mxu0 0
    %464 = vmatprep.mubr.bf16.mxu0 0
    %465 = vmatmul.mubr.bf16.gmra.mrb[0].mxu0 %v367
    %v466 = vpop.f32.mrb[0].mxu0
    %v467 = vadd.f32 0.0, %v466
    %v468 = vpop.f32.mrb[0].mxu0
    %v469 = vpop.f32.mrb[0].mxu0
    %v470 = vpop.f32.mrb[0].mxu0
    %471 = vdwg.mxu0
    %472 = vst [vmem:[#allocation13] sm:$0xff] %v467
    // Predicated region
    $region58: #{tpu_custom_call.1} parent=1 // pred_check
      _
    $region59: #{tpu_custom_call.1} parent=1 // pred_check_branch
      %474 = sbr.rel (0) target = $region61
    $region60: #{tpu_custom_call.1} parent=1 // pred_region
      %s476 = ssub.s32 128, 128
      %477 = vsyncadd [#allocation4], %s476
      %s479 = sshll.u32 [#allocation13], 4
      %s480 = int_to_ptr.vmem [resolvable:$true] %s479
      %482 = dma.vmem_to_hbm [thread:$0]  %s480, 128, %s8, [#allocation4]
    $region61: #{tpu_custom_call.1} parent=1 // pred_fallthru
      _
    // Predicated region
    $region62: #{tpu_custom_call.1} parent=1 // pred_check
      _
    $region63: #{tpu_custom_call.1} parent=1 // pred_check_branch
      %484 = sbr.rel (0) target = $region65
    $region64: #{tpu_custom_call.1} parent=1 // pred_region
      %s486 = ssub.s32 128, 128
      %487 = vsyncadd [#allocation15], %s486
      %s489 = sshll.u32 [#allocation14], 4
      %s490 = int_to_ptr.vmem [resolvable:$true] %s489
      %492 = dma.vmem_to_hbm [thread:$0]  %s490, 128, %s9, [#allocation15]
    $region65: #{tpu_custom_call.1} parent=1 // pred_fallthru
      _
    // Predicated region
    $region66: #{tpu_custom_call.1} parent=1 // pred_check
      _
    $region67: #{tpu_custom_call.1} parent=1 // pred_check_branch
      %494 = sbr.rel (0) target = $region69
    $region68: #{tpu_custom_call.1} parent=1 // pred_region
      %495 = dma.done [#allocation4], 128
    $region69: #{tpu_custom_call.1} parent=1 // pred_fallthru
      _
    // Predicated region
    $region70: #{tpu_custom_call.1} parent=1 // pred_check
      _
    $region71: #{tpu_custom_call.1} parent=1 // pred_check_branch
      %497 = sbr.rel (0) target = $region73
    $region72: #{tpu_custom_call.1} parent=1 // pred_region
      %498 = dma.done [#allocation15], 128
    $region73: #{tpu_custom_call.1} parent=1 // pred_fallthru
      _
    %499 = vsyncpa [#allocation3], 1
    %500 = vsyncpa [#allocation6], 1
    %501 = vsyncpa [#allocation9], 1
    %502 = vsyncpa [#allocation12], 1
    %503 = vsyncpa [#allocation4], 1
    %504 = vsyncpa [#allocation15], 1

</llo_original>
